<compile_context>
chip_gen: v5e
topology: v5e:2x2
jax: 0.10.0
libtpu: 0.0.40
codegen_flags: <defaults>
</compile_context>

<pallas_src>
import jax
import jax.numpy as jnp
from jax.experimental import pallas as pl
from jax.experimental.pallas import tpu as pltpu


def _round_up(v, m):
    return -(-v // m) * m


def _sublane_multiple(itemsize):
    # f32 -> 8, bf16 -> 16, int8/fp8 -> 32 (sub-32-bit dtypes pack along sublanes)
    return max(8, 32 // itemsize)


# ---------------------------------------------------------------------------
# Fused single-pass kernel: one grid step per batch, whole (C, S) slab in VMEM
# ---------------------------------------------------------------------------
def _pr_fused_kernel(x_ref, wa_ref, wc_ref, o_ref):
    # x_ref : (1, C, S)   spatial on the lane (last) axis
    # wa_ref: (C, C)      attention 1x1x1 conv weight (f32)
    # wc_ref: (Co, C)     output    1x1x1 conv weight (activation dtype)
    # o_ref : (1, Co, S)
    xs = x_ref[0]                                                        # (C, S)
    # global average pool over the spatial axis, f32 accumulation
    pooled = jnp.mean(xs.astype(jnp.float32), axis=-1, keepdims=True)    # (C, 1)
    atten = jax.nn.sigmoid(
        jnp.dot(wa_ref[...], pooled, preferred_element_type=jnp.float32))  # (C, 1)
    # x + x*atten == x * (1 + atten); atten broadcasts along the lane axis
    x_scaled = xs * (1.0 + atten).astype(xs.dtype)                        # (C, S)
    o_ref[0] = jnp.dot(wc_ref[...], x_scaled,
                       preferred_element_type=jnp.float32).astype(o_ref.dtype)


def _fused_vmem_estimate(C, Co, S, itemsize):
    sub = _sublane_multiple(itemsize)
    C_pad, Co_pad = _round_up(C, sub), _round_up(Co, sub)
    S_pad = _round_up(S, 128)
    xbytes = 2 * C_pad * S_pad * itemsize        # double-buffered input slab
    obytes = 2 * Co_pad * S_pad * itemsize       # double-buffered output slab
    tmps = (C_pad + Co_pad) * S_pad * 4          # f32 scaled-x + f32 dot-result temps
    return xbytes + obytes + tmps


def _fused_call(x_ncs, wa, wc, *, vmem_limit_bytes):
    N, C, S = x_ncs.shape
    Co = wc.shape[0]
    dtype = x_ncs.dtype
    itemsize = jnp.dtype(dtype).itemsize
    cost = pl.CostEstimate(
        flops=2 * N * Co * C * S + N * C * S + 2 * N * C * C,
        transcendentals=N * C,
        bytes_accessed=N * (C + Co) * S * itemsize + (C * C + Co * C) * itemsize,
    )
    return pl.pallas_call(
        _pr_fused_kernel,
        out_shape=jax.ShapeDtypeStruct((N, Co, S), dtype),
        grid_spec=pltpu.PrefetchScalarGridSpec(
            num_scalar_prefetch=0,
            grid=(N,),
            in_specs=[
                pl.BlockSpec((1, C, S), lambda n: (n, 0, 0)),
                pl.BlockSpec((C, C), lambda n: (0, 0)),
                pl.BlockSpec((Co, C), lambda n: (0, 0)),
            ],
            out_specs=pl.BlockSpec((1, Co, S), lambda n: (n, 0, 0)),
        ),
        compiler_params=pltpu.CompilerParams(
            dimension_semantics=("parallel",),
            vmem_limit_bytes=vmem_limit_bytes,
        ),
        cost_estimate=cost,
    )(x_ncs, wa.astype(jnp.float32), wc.astype(dtype))


# ---------------------------------------------------------------------------
# Tiled fallback: per-batch weight (attention folded in), spatial tiles on lanes
# ---------------------------------------------------------------------------
def _pr_matmul_kernel(x_ref, w_ref, o_ref):
    # x_ref : (1, C, TS)   one spatial tile
    # w_ref : (1, Co, C)   per-batch attention-scaled output-conv weight
    # o_ref : (1, Co, TS)
    o_ref[0] = jnp.dot(w_ref[0], x_ref[0],
                       preferred_element_type=jnp.float32).astype(o_ref.dtype)


def _choose_tile_s(S, C, Co, itemsize, n_batch, budget_bytes=24 * 1024 * 1024):
    sub = _sublane_multiple(itemsize)
    C_pad, Co_pad = _round_up(C, sub), _round_up(Co, sub)
    # 3-deep input pipeline + double-buffered output + f32 dot-result temp, per S elem
    per_s = (3 * C_pad + 2 * Co_pad) * itemsize + Co_pad * 4
    ts = max(128, (budget_bytes // per_s) // 128 * 128)
    ts = min(ts, _round_up(S, 128))
    # keep >= 4 total grid steps so both v7x TensorCores get work
    min_steps = 4
    if n_batch * pl.cdiv(S, ts) < min_steps and S > 128:
        want_tiles = -(-min_steps // n_batch)
        ts = max(128, _round_up(pl.cdiv(S, want_tiles), 128))
    return ts


def _x_block_spec(C, ts):
    idx = lambda n, s: (n, 0, s)
    try:
        # 3-deep input pipeline keeps DMAs ahead of the body with small tiles
        # (most useful on v7x; harmless elsewhere).
        return pl.BlockSpec((1, C, ts), idx, pipeline_mode=pl.Buffered(3))
    except TypeError:
        return pl.BlockSpec((1, C, ts), idx)


def _tiled_call(x_ncs, wa, wc, *, tile_s, vmem_limit_bytes):
    N, C, S = x_ncs.shape
    Co = wc.shape[0]
    dtype = x_ncs.dtype
    itemsize = jnp.dtype(dtype).itemsize

    # Tiny prologue in plain JAX.  dtype=f32 fuses the upcast into the reduce.
    # NOTE: this path streams x from HBM twice (mean here + matmul in-kernel).
    pooled = jnp.mean(x_ncs, axis=2, dtype=jnp.float32)                   # (N, C)
    wa_f32 = wa.astype(jnp.float32)
    atten = jax.nn.sigmoid(pooled @ wa_f32.T)                             # (N, C)
    # x + x*atten == x*(1+atten); atten is per *input* channel -> fold into weight
    wc_scaled = (wc.astype(jnp.float32)[None] * (1.0 + atten)[:, None, :]
                 ).astype(dtype)                                          # (N, Co, C)

    ts = tile_s if tile_s is not None else _choose_tile_s(S, C, Co, itemsize, N)
    ts = max(128, (ts // 128) * 128)
    num_tiles = pl.cdiv(S, ts)      # ragged last tile -> masked store, no pad/slice

    cost = pl.CostEstimate(
        flops=2 * N * Co * C * S,
        transcendentals=0,
        bytes_accessed=N * (C + Co) * S * itemsize + N * Co * C * itemsize,
    )
    return pl.pallas_call(
        _pr_matmul_kernel,
        out_shape=jax.ShapeDtypeStruct((N, Co, S), dtype),
        grid_spec=pltpu.PrefetchScalarGridSpec(
            num_scalar_prefetch=0,
            grid=(N, num_tiles),
            in_specs=[
                _x_block_spec(C, ts),
                pl.BlockSpec((1, Co, C), lambda n, s: (n, 0, 0)),
            ],
            out_specs=pl.BlockSpec((1, Co, ts), lambda n, s: (n, 0, s)),
        ),
        compiler_params=pltpu.CompilerParams(
            dimension_semantics=("parallel", "parallel"),
            vmem_limit_bytes=vmem_limit_bytes,
        ),
        cost_estimate=cost,
    )(x_ncs, wc_scaled)


# ---------------------------------------------------------------------------
# Public wrapper
# ---------------------------------------------------------------------------
def point_reinforcement(x_ncdhw, w_atten, w_conv, *, tile_s=None, fuse=None,
                        vmem_limit_bytes=48 * 1024 * 1024):
    """Point_Reinforcement forward.

    x_ncdhw : (N, C, D, H, W)
    w_atten : (C, C, 1, 1, 1)   conv_atten weight (bias=False)
    w_conv  : (Co, C, 1, 1, 1)  conv weight (bias=False)
    """
    N, C, D, H, W = x_ncdhw.shape
    Co = w_conv.shape[0]
    S = D * H * W
    dtype = x_ncdhw.dtype
    itemsize = jnp.dtype(dtype).itemsize

    x_ncs = x_ncdhw.reshape(N, C, S)        # layout no-op: spatial on the lane axis
    wa = w_atten.reshape(C, C)
    wc = w_conv.reshape(Co, C)

    if fuse is None:
        # single HBM pass whenever the per-batch slab (with sublane padding and
        # double buffering) fits comfortably in VMEM on v5e/v6e/v7x
        fuse = _fused_vmem_estimate(C, Co, S, itemsize) <= 32 * 1024 * 1024

    if fuse:
        out_ncs = _fused_call(x_ncs, wa, wc, vmem_limit_bytes=vmem_limit_bytes)
    else:
        out_ncs = _tiled_call(x_ncs, wa, wc, tile_s=tile_s,
                              vmem_limit_bytes=vmem_limit_bytes)
    return out_ncs.reshape(N, Co, D, H, W)


def _reference(x, w_atten, w_conv):
    """Pure-JAX reference mirroring the PyTorch forward."""
    N, C, D, H, W = x.shape
    Co = w_conv.shape[0]
    pooled = jnp.mean(x, axis=(2, 3, 4), keepdims=True)                   # (N,C,1,1,1)
    atten = jax.nn.sigmoid(
        jnp.einsum('oc,ncdhw->nodhw', w_atten.reshape(C, C), pooled))     # (N,C,1,1,1)
    xx = x + x * atten
    return jnp.einsum('oc,ncdhw->nodhw', w_conv.reshape(Co, C), xx)       # (N,Co,D,H,W)


if __name__ == "__main__":
    key = jax.random.PRNGKey(0)
    k_x, k_wa, k_wc, k_x2 = jax.random.split(key, 4)

    N, C_in, C_out = 2, 4, 8
    D = H = W = 16                       # S = 4096

    x = jax.random.normal(k_x, (N, C_in, D, H, W), dtype=jnp.float32)
    w_atten = jax.random.normal(k_wa, (C_in, C_in, 1, 1, 1), dtype=jnp.float32) * 0.1
    w_conv = jax.random.normal(k_wc, (C_out, C_in, 1, 1, 1), dtype=jnp.float32) * 0.1

    ref = _reference(x, w_atten, w_conv)

    # 1) default path: fully fused single-pass kernel (grid=(N,))
    out = jax.block_until_ready(point_reinforcement(x, w_atten, w_conv))
    assert out.shape == (N, C_out, D, H, W), out.shape
    assert jnp.allclose(out, ref, atol=1e-4, rtol=1e-4), \
        float(jnp.max(jnp.abs(out - ref)))

    # 2) tiled fallback path, divisible S: grid (N=2, S_tiles=4), no padding
    out_t = jax.block_until_ready(
        point_reinforcement(x, w_atten, w_conv, fuse=False, tile_s=1024))
    assert jnp.allclose(out_t, ref, atol=1e-4, rtol=1e-4), \
        float(jnp.max(jnp.abs(out_t - ref)))

    # 3) non-divisible spatial size: ragged last tile (masked store, no pad/slice)
    D2, H2, W2 = 5, 7, 9                 # S = 315, not a multiple of 128
    x2 = jax.random.normal(k_x2, (N, C_in, D2, H2, W2), dtype=jnp.float32)
    ref2 = _reference(x2, w_atten, w_conv)
    out2_f = jax.block_until_ready(
        point_reinforcement(x2, w_atten, w_conv, fuse=True))
    out2_t = jax.block_until_ready(
        point_reinforcement(x2, w_atten, w_conv, fuse=False, tile_s=128))
    assert jnp.allclose(out2_f, ref2, atol=1e-4, rtol=1e-4), \
        float(jnp.max(jnp.abs(out2_f - ref2)))
    assert jnp.allclose(out2_t, ref2, atol=1e-4, rtol=1e-4), \
        float(jnp.max(jnp.abs(out2_t - ref2)))

    print("KERNEL_OK")
</pallas_src>

<mosaic_0001>
module attributes {stable_mosaic.version = 11 : i64} {
  func.func @_pr_fused_kernel(%arg0: i32, %arg1: memref<1x4x4096xf32, #tpu.memory_space<vmem>>, %arg2: memref<4x4xf32, #tpu.memory_space<vmem>>, %arg3: memref<8x4xf32, #tpu.memory_space<vmem>>, %arg4: memref<1x8x4096xf32, #tpu.memory_space<vmem>>) attributes {dimension_semantics = [#tpu.dimension_semantics<parallel>], iteration_bounds = array<i64: 2>, scalar_prefetch = 0 : i64, scratch_operands = 0 : i64, tpu.core_type = #tpu.core_type<tc>, window_params = [{transform_indices = @transform_0, window_bounds = array<i64: 1, 4, 4096>}, {pipeline_mode = #tpu.pipeline_mode<synchronous>, transform_indices = @transform_1, window_bounds = array<i64: 4, 4>}, {pipeline_mode = #tpu.pipeline_mode<synchronous>, transform_indices = @transform_2, window_bounds = array<i64: 8, 4>}, {transform_indices = @transform_3, window_bounds = array<i64: 1, 8, 4096>}]} {
    %c0 = arith.constant 0 : index
    %c0_0 = arith.constant 0 : index
    %c0_1 = arith.constant 0 : index
    %0 = vector.load %arg1[%c0, %c0_0, %c0_1] : memref<1x4x4096xf32, #tpu.memory_space<vmem>>, vector<1x4x4096xf32>
    %1 = vector.shape_cast %0 : vector<1x4x4096xf32> to vector<4x4096xf32>
    %cst = arith.constant dense<0.000000e+00> : vector<4xf32>
    %2 = vector.multi_reduction <add>, %1, %cst [1] : vector<4x4096xf32> to vector<4xf32>
    %3 = vector.shape_cast %2 : vector<4xf32> to vector<4x1xf32>
    %cst_2 = arith.constant 4.096000e+03 : f32
    %4 = vector.broadcast %cst_2 : f32 to vector<4x1xf32>
    %5 = arith.divf %3, %4 : vector<4x1xf32>
    %c0_3 = arith.constant 0 : index
    %c0_4 = arith.constant 0 : index
    %6 = vector.load %arg2[%c0_3, %c0_4] : memref<4x4xf32, #tpu.memory_space<vmem>>, vector<4x4xf32>
    %cst_5 = arith.constant dense<0.000000e+00> : vector<4x1xf32>
    %7 = tpu.matmul %6, %5, %cst_5 {dimension_numbers = #tpu.dot_dimension_numbers<[1], [0], [0], [1], [0, 0, 1, 1], [], []>} : vector<4x4xf32>, vector<4x1xf32>, vector<4x1xf32> -> vector<4x1xf32>
    %8 = arith.negf %7 : vector<4x1xf32>
    %9 = math.exp %8 : vector<4x1xf32>
    %cst_6 = arith.constant 1.000000e+00 : f32
    %10 = vector.broadcast %cst_6 : f32 to vector<4x1xf32>
    %11 = arith.addf %10, %9 : vector<4x1xf32>
    %12 = arith.divf %10, %11 : vector<4x1xf32>
    %cst_7 = arith.constant 1.000000e+00 : f32
    %13 = vector.broadcast %cst_7 : f32 to vector<4x1xf32>
    %14 = arith.addf %13, %12 : vector<4x1xf32>
    %15 = vector.broadcast %14 : vector<4x1xf32> to vector<4x4096xf32>
    %16 = arith.mulf %1, %15 : vector<4x4096xf32>
    %c0_8 = arith.constant 0 : index
    %c0_9 = arith.constant 0 : index
    %17 = vector.load %arg3[%c0_8, %c0_9] : memref<8x4xf32, #tpu.memory_space<vmem>>, vector<8x4xf32>
    %cst_10 = arith.constant dense<0.000000e+00> : vector<8x4096xf32>
    %18 = tpu.matmul %17, %16, %cst_10 {dimension_numbers = #tpu.dot_dimension_numbers<[1], [0], [0], [1], [0, 0, 1, 1], [], []>} : vector<8x4xf32>, vector<4x4096xf32>, vector<8x4096xf32> -> vector<8x4096xf32>
    %c0_11 = arith.constant 0 : index
    %c0_12 = arith.constant 0 : index
    %c0_13 = arith.constant 0 : index
    %19 = vector.load %arg4[%c0_11, %c0_12, %c0_13] : memref<1x8x4096xf32, #tpu.memory_space<vmem>>, vector<1x8x4096xf32>
    %20 = vector.shape_cast %19 : vector<1x8x4096xf32> to vector<8x4096xf32>
    %21 = vector.shape_cast %18 : vector<8x4096xf32> to vector<1x8x4096xf32>
    tpu.vector_store %arg4[%c0_11, %c0_12, %c0_13], %21 {strides = array<i32>} : memref<1x8x4096xf32, #tpu.memory_space<vmem>>, vector<1x8x4096xf32>,
    return
  }
  func.func @transform_0(%arg0: i32) -> (i32, i32, i32) {
    %c0_i32 = arith.constant 0 : i32
    %c0_i32_0 = arith.constant 0 : i32
    %c0_i32_1 = arith.constant 0 : i32
    return %arg0, %c0_i32, %c0_i32_0 : i32, i32, i32
  }
  func.func @transform_1(%arg0: i32) -> (i32, i32) {
    %c0_i32 = arith.constant 0 : i32
    %c0_i32_0 = arith.constant 0 : i32
    %c0_i32_1 = arith.constant 0 : i32
    return %c0_i32, %c0_i32_0 : i32, i32
  }
  func.func @transform_2(%arg0: i32) -> (i32, i32) {
    %c0_i32 = arith.constant 0 : i32
    %c0_i32_0 = arith.constant 0 : i32
    %c0_i32_1 = arith.constant 0 : i32
    return %c0_i32, %c0_i32_0 : i32, i32
  }
  func.func @transform_3(%arg0: i32) -> (i32, i32, i32) {
    %c0_i32 = arith.constant 0 : i32
    %c0_i32_0 = arith.constant 0 : i32
    %c0_i32_1 = arith.constant 0 : i32
    return %arg0, %c0_i32, %c0_i32_0 : i32, i32, i32
  }
}

</mosaic_0001>

<llo_original>
// kernel: tpu_custom_call.1
$region0: #{tpu_custom_call.1}
  #allocation0 [shape = 'u32[]', space=smem, size = 0x4, offset = 0x4, fixed_abs, tag = 'smem constant byte address 0x4 - core index']
  #allocation1 [shape = 'u32[72,128]{1,0:T(1,128)}', space=vmem, size = 0x9000, scoped, tag = 'internal scratch']
  %s0 = inlined_call_operand.hbm [shape: f32[2,4,4096], index: 0, kind: input, shape index: {}]
  %s1 = inlined_call_operand.vmem [shape: f32[4,4], index: 1, kind: input, shape index: {}]
  %s2 = inlined_call_operand.vmem [shape: f32[8,4], index: 2, kind: input, shape index: {}]
  %s3 = inlined_call_operand.hbm [shape: f32[2,8,4096], index: 3, kind: output, shape index: {}]
  %s4 = sld [smem:[#allocation0]]
  $region49: #{tpu_custom_call.1} parent=0
    _
  %s6 = ssub.s32 1, %s4
  %s7 = scalar_select 0, %s6, %s4
  $region1: #{tpu_custom_call.1} parent=0
    #allocation2 [shape = 'u8[131072]{0}', space=vmem, size = 0x20000, scoped, tag = 'input window, operand 0']
    #allocation3 [shape = 's32[2]{0}', space=sflag, size = 0x8, scoped, tag = 'scoped memory for tpu_custom_call.1']
    #allocation4 [shape = 's32[2]{0}', space=sflag, size = 0x8, scoped, tag = 'scoped memory for tpu_custom_call.1']
    #allocation5 [shape = 'u8[262144]{0}', space=vmem, size = 0x40000, scoped, tag = 'output window, operand 0']
    %8 = vsyncpa [#allocation3], 0
    %s9 = scalar_lea.sflag [#allocation3], 1
    %10 = vsyncpa %s9, 0
    %11 = vsyncpa [#allocation4], 0
    %s12 = scalar_lea.sflag [#allocation4], 1
    %13 = vsyncpa %s12, 0
    loop: start=0, step=1, limit=4
    $region2: #{tpu_custom_call.1} parent=1 // loop_pre_header
      _
    $region3: #{tpu_custom_call.1} parent=1 // loop_header
      %s15 = sphi 0, %s19
      %p16 = scmp.ge.s32.totalorder %s15, 4
      %s25 = sphi 0, %s27
      %s28 = sphi 0, %s25
      %s29 = sphi 0, %s28
      %s45 = sphi 0, %s29
      %s49 = sphi 0, %s49
      %s51 = sphi 0, %s49
      %s52 = sphi 0, %s51
      %s66 = sphi 0, %s52
      %s70 = sphi 0, %s70
      %s72 = sphi 0, %s70
      %s73 = sphi 0, %s72
      %s87 = sphi 0, %s73
      %s93 = sphi 0, %s95
      %s96 = sphi 0, %s93
      %s97 = sphi 0, %s96
      %s113 = sphi 0, %s97
    $region4: #{tpu_custom_call.1} parent=1 // loop_header_branch
      %18 = sbr.rel (%p16) target = $region8
    $region5: #{tpu_custom_call.1} parent=1 // loop_body
      %s20 = ssub.s32 %s15, 1
      %s21 = ssub.s32 %s15, 2
      %s22 = sadd.s32 %s15, 1
      %s23 = ssub.s32 %s15, %s22
      %p24 = scmp.eq.s32.totalorder %s23, 0
      %s26 = sadd.s32 %s25, 1
      %s27 = scalar_select %p24, %s25, %s26
      %p30 = pneg %p24
      %p31 = scmp.eq.s32.totalorder %s15, 1
      %p32 = por %p30, %p31
      %p33 = scmp.ne.s32.totalorder %s25, %s28
      %p34 = scmp.eq.s32.totalorder %s15, 0
      %p35 = por %p33, %p34
      %p36 = scmp.ne.s32.totalorder %s25, %s28
      %p37 = scmp.eq.s32.totalorder %s20, 1
      %p38 = por %p36, %p37
      %p39 = scmp.ne.s32.totalorder %s28, %s29
      %p40 = scmp.eq.s32.totalorder %s20, 0
      %p41 = por %p39, %p40
      %p42 = scmp.ne.s32.totalorder %s28, %s29
      %p43 = scmp.eq.s32.totalorder %s21, 1
      %p44 = por %p42, %p43
      %p46 = scmp.ne.s32.totalorder %s29, %s45
      %p47 = scmp.eq.s32.totalorder %s21, 0
      %p48 = por %p46, %p47
      %s50 = sadd.s32 %s49, 1
      %p53 = scmp.eq.s32.totalorder %s15, 1
      %p54 = scmp.ne.s32.totalorder %s49, %s51
      %p55 = scmp.eq.s32.totalorder %s15, 0
      %p56 = por %p54, %p55
      %p57 = scmp.ne.s32.totalorder %s49, %s51
      %p58 = scmp.eq.s32.totalorder %s20, 1
      %p59 = por %p57, %p58
      %p60 = scmp.ne.s32.totalorder %s51, %s52
      %p61 = scmp.eq.s32.totalorder %s20, 0
      %p62 = por %p60, %p61
      %p63 = scmp.ne.s32.totalorder %s51, %s52
      %p64 = scmp.eq.s32.totalorder %s21, 1
      %p65 = por %p63, %p64
      %p67 = scmp.ne.s32.totalorder %s52, %s66
      %p68 = scmp.eq.s32.totalorder %s21, 0
      %p69 = por %p67, %p68
      %s71 = sadd.s32 %s70, 1
      %p74 = scmp.eq.s32.totalorder %s15, 1
      %p75 = scmp.ne.s32.totalorder %s70, %s72
      %p76 = scmp.eq.s32.totalorder %s15, 0
      %p77 = por %p75, %p76
      %p78 = scmp.ne.s32.totalorder %s70, %s72
      %p79 = scmp.eq.s32.totalorder %s20, 1
      %p80 = por %p78, %p79
      %p81 = scmp.ne.s32.totalorder %s72, %s73
      %p82 = scmp.eq.s32.totalorder %s20, 0
      %p83 = por %p81, %p82
      %p84 = scmp.ne.s32.totalorder %s72, %s73
      %p85 = scmp.eq.s32.totalorder %s21, 1
      %p86 = por %p84, %p85
      %p88 = scmp.ne.s32.totalorder %s73, %s87
      %p89 = scmp.eq.s32.totalorder %s21, 0
      %p90 = por %p88, %p89
      %s91 = ssub.s32 %s15, %s22
      %p92 = scmp.eq.s32.totalorder %s91, 0
      %s94 = sadd.s32 %s93, 1
      %s95 = scalar_select %p92, %s93, %s94
      %p98 = pneg %p92
      %p99 = scmp.eq.s32.totalorder %s15, 1
      %p100 = por %p98, %p99
      %p101 = scmp.ne.s32.totalorder %s93, %s96
      %p102 = scmp.eq.s32.totalorder %s15, 0
      %p103 = por %p101, %p102
      %p104 = scmp.ne.s32.totalorder %s93, %s96
      %p105 = scmp.eq.s32.totalorder %s20, 1
      %p106 = por %p104, %p105
      %p107 = scmp.ne.s32.totalorder %s96, %s97
      %p108 = scmp.eq.s32.totalorder %s20, 0
      %p109 = por %p107, %p108
      %p110 = scmp.ne.s32.totalorder %s96, %s97
      %p111 = scmp.eq.s32.totalorder %s21, 1
      %p112 = por %p110, %p111
      %p114 = scmp.ne.s32.totalorder %s97, %s113
      %p115 = scmp.eq.s32.totalorder %s21, 0
      %p116 = por %p114, %p115
      %p117 = scmp.le.s32.totalorder 1, %s15
      %p118 = scmp.lt.s32.totalorder %s15, 3
      %p119 = pnand %p117, %p118
      %p120 = pneg %p119
      // Predicated region
      $region9: #{tpu_custom_call.1} parent=5 // pred_check
        _
      $region10: #{tpu_custom_call.1} parent=5 // pred_check_branch
        %122 = sbr.rel (%p119) target = $region12
      $region11: #{tpu_custom_call.1} parent=5 // pred_region
        %s123 = ssub.s32 %s15, 1
        // Predicated region
        $region13: #{tpu_custom_call.1} parent=11 // pred_check
          %p124 = pneg %p62
        $region14: #{tpu_custom_call.1} parent=11 // pred_check_branch
          %126 = sbr.rel (%p124) target = $region16
        $region15: #{tpu_custom_call.1} parent=11 // pred_region
          _
        $region16: #{tpu_custom_call.1} parent=11 // pred_fallthru
          _
        // Predicated region
        $region17: #{tpu_custom_call.1} parent=11 // pred_check
          %p127 = pneg %p83
        $region18: #{tpu_custom_call.1} parent=11 // pred_check_branch
          %129 = sbr.rel (%p127) target = $region20
        $region19: #{tpu_custom_call.1} parent=11 // pred_region
          _
        $region20: #{tpu_custom_call.1} parent=11 // pred_fallthru
          _
      $region12: #{tpu_custom_call.1} parent=5 // pred_fallthru
        _
      %p130 = scmp.lt.s32.totalorder %s15, 2
      // Predicated region
      $region21: #{tpu_custom_call.1} parent=5 // pred_check
        %p131 = pneg %p130
      $region22: #{tpu_custom_call.1} parent=5 // pred_check_branch
        %133 = sbr.rel (%p131) target = $region24
      $region23: #{tpu_custom_call.1} parent=5 // pred_region
        // Predicated region
        $region25: #{tpu_custom_call.1} parent=23 // pred_check
          %p134 = pneg %p35
        $region26: #{tpu_custom_call.1} parent=23 // pred_check_branch
          %136 = sbr.rel (%p134) target = $region28
        $region27: #{tpu_custom_call.1} parent=23 // pred_region
          %s137 = sand.u32 %s25, 1
          %s138 = scalar_lea.sflag [#allocation3], %s137
          %s139 = sand.u32 %s25, 1
          %s140 = smul.addr %s139, 128
          %s141 = scalar_lea.vmem [#allocation2], %s140
          %143 = vsyncadd %s138, 0
          %s144 = smul.addr %s15, 32
          %s145 = smul.addr %s144, 4
          %s146 = scalar_lea.hbm %s0, %s145
          %s148 = sshll.u32 %s146, 4
          %s149 = int_to_ptr.hbm [resolvable:$true] %s148
          %s150 = sshll.u32 %s141, 4
          %s151 = int_to_ptr.vmem [resolvable:$true] %s150
          %153 = dma.hbm_to_vmem [thread:$0]  %s149, 2048, %s151, %s138
        $region28: #{tpu_custom_call.1} parent=23 // pred_fallthru
          _
      $region24: #{tpu_custom_call.1} parent=5 // pred_fallthru
        _
      %p154 = scmp.le.s32.totalorder 1, %s15
      %p155 = scmp.lt.s32.totalorder %s15, 3
      %p156 = pnand %p154, %p155
      %p157 = pneg %p156
      // Predicated region
      $region29: #{tpu_custom_call.1} parent=5 // pred_check
        _
      $region30: #{tpu_custom_call.1} parent=5 // pred_check_branch
        %159 = sbr.rel (%p156) target = $region32
      $region31: #{tpu_custom_call.1} parent=5 // pred_region
        %s160 = ssub.s32 %s15, 1
        %s161 = sand.u32 %s28, 1
        %s162 = scalar_lea.sflag [#allocation3], %s161
        %s163 = sand.u32 %s28, 1
        %s164 = smul.addr %s163, 128
        %s165 = scalar_lea.vmem [#allocation2], %s164
        // Predicated region
        $region33: #{tpu_custom_call.1} parent=31 // pred_check
          %p166 = pneg %p41
        $region34: #{tpu_custom_call.1} parent=31 // pred_check_branch
          %168 = sbr.rel (%p166) target = $region36
        $region35: #{tpu_custom_call.1} parent=31 // pred_region
          %170 = dma.done %s162, 2048
        $region36: #{tpu_custom_call.1} parent=31 // pred_fallthru
          _
        %s171 = sand.u32 %s28, 1
        %s172 = scalar_lea.sflag [#allocation3], %s171
        %s173 = sand.u32 %s28, 1
        %s174 = smul.addr %s173, 128
        %s175 = scalar_lea.vmem [#allocation2], %s174
        %p176 = pneg %p41
        %p177 = pneg %p38
        %p178 = pneg %p62
        %p179 = pneg %p59
        %p180 = pneg %p83
        %p181 = pneg %p80
        %p182 = pneg %p109
        %p183 = pneg %p106
        %s184 = sand.u32 %s96, 1
        %s185 = scalar_lea.sflag [#allocation4], %s184
        %s186 = sand.u32 %s96, 1
        %s187 = smul.addr %s186, 256
        %s188 = scalar_lea.vmem [#allocation5], %s187
        %v189 = vld [vmem:[%s165] sm:$0xff]
        %v190 = vld [vmem:[%s165 + $0x8] sm:$0xff]
        %v191 = vld [vmem:[%s165 + $0x10] sm:$0xff]
        %v192 = vld [vmem:[%s165 + $0x18] sm:$0xff]
        %v193 = vld [vmem:[%s165 + $0x20] sm:$0xff]
        %v194 = vld [vmem:[%s165 + $0x28] sm:$0xff]
        %v195 = vld [vmem:[%s165 + $0x30] sm:$0xff]
        %v196 = vld [vmem:[%s165 + $0x38] sm:$0xff]
        %v197 = vld [vmem:[%s165 + $0x40] sm:$0xff]
        %v198 = vld [vmem:[%s165 + $0x48] sm:$0xff]
        %v199 = vld [vmem:[%s165 + $0x50] sm:$0xff]
        %v200 = vld [vmem:[%s165 + $0x58] sm:$0xff]
        %v201 = vld [vmem:[%s165 + $0x60] sm:$0xff]
        %v202 = vld [vmem:[%s165 + $0x68] sm:$0xff]
        %v203 = vld [vmem:[%s165 + $0x70] sm:$0xff]
        %v204 = vld [vmem:[%s165 + $0x78] sm:$0xff]
        %221 = vst [vmem:[#allocation1] ss:$2 sm:$0xff] %v189
        %s222 = scalar_lea.vmem [#allocation1], 16
        %223 = vst [vmem:[%s222] ss:$2 sm:$0xff] %v190
        %s224 = scalar_lea.vmem [#allocation1], 32
        %225 = vst [vmem:[%s224] ss:$2 sm:$0xff] %v191
        %s226 = scalar_lea.vmem [#allocation1], 48
        %227 = vst [vmem:[%s226] ss:$2 sm:$0xff] %v192
        %v228 = vld.sshfl [vmem:[#allocation1] sm:$0xff pattern:$0x75316420]
        %v229 = vld.sshfl [vmem:[#allocation1 + $0x8] sm:$0xff pattern:$0x75316420]
        %v230 = vld.sshfl [vmem:[#allocation1 + $0x10] sm:$0xff pattern:$0x75316420]
        %v231 = vld.sshfl [vmem:[#allocation1 + $0x18] sm:$0xff pattern:$0x75316420]
        %v232 = vld.sshfl [vmem:[#allocation1 + $0x20] sm:$0xff pattern:$0x75316420]
        %v233 = vld.sshfl [vmem:[#allocation1 + $0x28] sm:$0xff pattern:$0x75316420]
        %v234 = vld.sshfl [vmem:[#allocation1 + $0x30] sm:$0xff pattern:$0x75316420]
        %v235 = vld.sshfl [vmem:[#allocation1 + $0x38] sm:$0xff pattern:$0x75316420]
        %236 = vst [vmem:[#allocation1] ss:$2 sm:$0xff] %v193
        %237 = vst [vmem:[%s222] ss:$2 sm:$0xff] %v194
        %238 = vst [vmem:[%s224] ss:$2 sm:$0xff] %v195
        %239 = vst [vmem:[%s226] ss:$2 sm:$0xff] %v196
        %v240 = vld.sshfl [vmem:[#allocation1] sm:$0xff pattern:$0x75316420]
        %v241 = vld.sshfl [vmem:[#allocation1 + $0x8] sm:$0xff pattern:$0x75316420]
        %v242 = vld.sshfl [vmem:[#allocation1 + $0x10] sm:$0xff pattern:$0x75316420]
        %v243 = vld.sshfl [vmem:[#allocation1 + $0x18] sm:$0xff pattern:$0x75316420]
        %v244 = vld.sshfl [vmem:[#allocation1 + $0x20] sm:$0xff pattern:$0x75316420]
        %v245 = vld.sshfl [vmem:[#allocation1 + $0x28] sm:$0xff pattern:$0x75316420]
        %v246 = vld.sshfl [vmem:[#allocation1 + $0x30] sm:$0xff pattern:$0x75316420]
        %v247 = vld.sshfl [vmem:[#allocation1 + $0x38] sm:$0xff pattern:$0x75316420]
        %248 = vst [vmem:[#allocation1] ss:$2 sm:$0xff] %v197
        %249 = vst [vmem:[%s222] ss:$2 sm:$0xff] %v198
        %250 = vst [vmem:[%s224] ss:$2 sm:$0xff] %v199
        %251 = vst [vmem:[%s226] ss:$2 sm:$0xff] %v200
        %v252 = vld.sshfl [vmem:[#allocation1] sm:$0xff pattern:$0x75316420]
        %v253 = vld.sshfl [vmem:[#allocation1 + $0x8] sm:$0xff pattern:$0x75316420]
        %v254 = vld.sshfl [vmem:[#allocation1 + $0x10] sm:$0xff pattern:$0x75316420]
        %v255 = vld.sshfl [vmem:[#allocation1 + $0x18] sm:$0xff pattern:$0x75316420]
        %v256 = vld.sshfl [vmem:[#allocation1 + $0x20] sm:$0xff pattern:$0x75316420]
        %v257 = vld.sshfl [vmem:[#allocation1 + $0x28] sm:$0xff pattern:$0x75316420]
        %v258 = vld.sshfl [vmem:[#allocation1 + $0x30] sm:$0xff pattern:$0x75316420]
        %v259 = vld.sshfl [vmem:[#allocation1 + $0x38] sm:$0xff pattern:$0x75316420]
        %260 = vst [vmem:[#allocation1] ss:$2 sm:$0xff] %v201
        %261 = vst [vmem:[%s222] ss:$2 sm:$0xff] %v202
        %262 = vst [vmem:[%s224] ss:$2 sm:$0xff] %v203
        %263 = vst [vmem:[%s226] ss:$2 sm:$0xff] %v204
        %v264 = vld.sshfl [vmem:[#allocation1] sm:$0xff pattern:$0x75316420]
        %v265 = vld.sshfl [vmem:[#allocation1 + $0x8] sm:$0xff pattern:$0x75316420]
        %v266 = vld.sshfl [vmem:[#allocation1 + $0x10] sm:$0xff pattern:$0x75316420]
        %v267 = vld.sshfl [vmem:[#allocation1 + $0x18] sm:$0xff pattern:$0x75316420]
        %v268 = vld.sshfl [vmem:[#allocation1 + $0x20] sm:$0xff pattern:$0x75316420]
        %v269 = vld.sshfl [vmem:[#allocation1 + $0x28] sm:$0xff pattern:$0x75316420]
        %v270 = vld.sshfl [vmem:[#allocation1 + $0x30] sm:$0xff pattern:$0x75316420]
        %v271 = vld.sshfl [vmem:[#allocation1 + $0x38] sm:$0xff pattern:$0x75316420]
        %vm304 = vcmask 1043456
        %v305 = vsel %vm304, %v228, 0.0
        %v306 = vsel %vm304, %v229, 0.0
        %v307 = vadd.f32 %v305, %v306
        %v308 = vsel %vm304, %v230, 0.0
        %v309 = vadd.f32 %v307, %v308
        %v310 = vsel %vm304, %v231, 0.0
        %v311 = vadd.f32 %v309, %v310
        %v312 = vsel %vm304, %v232, 0.0
        %v313 = vadd.f32 %v311, %v312
        %v314 = vsel %vm304, %v233, 0.0
        %v315 = vadd.f32 %v313, %v314
        %v316 = vsel %vm304, %v234, 0.0
        %v317 = vadd.f32 %v315, %v316
        %v318 = vsel %vm304, %v235, 0.0
        %v319 = vadd.f32 %v317, %v318
        %v320 = vsel %vm304, %v240, 0.0
        %v321 = vadd.f32 %v319, %v320
        %v322 = vsel %vm304, %v241, 0.0
        %v323 = vadd.f32 %v321, %v322
        %v324 = vsel %vm304, %v242, 0.0
        %v325 = vadd.f32 %v323, %v324
        %v326 = vsel %vm304, %v243, 0.0
        %v327 = vadd.f32 %v325, %v326
        %v328 = vsel %vm304, %v244, 0.0
        %v329 = vadd.f32 %v327, %v328
        %v330 = vsel %vm304, %v245, 0.0
        %v331 = vadd.f32 %v329, %v330
        %v332 = vsel %vm304, %v246, 0.0
        %v333 = vadd.f32 %v331, %v332
        %v334 = vsel %vm304, %v247, 0.0
        %v335 = vadd.f32 %v333, %v334
        %v336 = vsel %vm304, %v252, 0.0
        %v337 = vadd.f32 %v335, %v336
        %v338 = vsel %vm304, %v253, 0.0
        %v339 = vadd.f32 %v337, %v338
        %v340 = vsel %vm304, %v254, 0.0
        %v341 = vadd.f32 %v339, %v340
        %v342 = vsel %vm304, %v255, 0.0
        %v343 = vadd.f32 %v341, %v342
        %v344 = vsel %vm304, %v256, 0.0
        %v345 = vadd.f32 %v343, %v344
        %v346 = vsel %vm304, %v257, 0.0
        %v347 = vadd.f32 %v345, %v346
        %v348 = vsel %vm304, %v258, 0.0
        %v349 = vadd.f32 %v347, %v348
        %v350 = vsel %vm304, %v259, 0.0
        %v351 = vadd.f32 %v349, %v350
        %v352 = vsel %vm304, %v264, 0.0
        %v353 = vadd.f32 %v351, %v352
        %v354 = vsel %vm304, %v265, 0.0
        %v355 = vadd.f32 %v353, %v354
        %v356 = vsel %vm304, %v266, 0.0
        %v357 = vadd.f32 %v355, %v356
        %v358 = vsel %vm304, %v267, 0.0
        %v359 = vadd.f32 %v357, %v358
        %v360 = vsel %vm304, %v268, 0.0
        %v361 = vadd.f32 %v359, %v360
        %v362 = vsel %vm304, %v269, 0.0
        %v363 = vadd.f32 %v361, %v362
        %v364 = vsel %vm304, %v270, 0.0
        %v365 = vadd.f32 %v363, %v364
        %v366 = vsel %vm304, %v271, 0.0
        %v367 = vadd.f32 %v365, %v366
        %368 = vadd.xlane.f32.xlu0 %v367
        %v369 = vpop.xlane.xlu0 %368
        %v370 = vrcp.pop 4096.0
        %v371 = vmul.f32 4096.0, %v370
        %v372 = vsub.f32 1.0, %v371
        %v373 = vmul.f32 %v370, %v372
        %v374 = vadd.f32 %v370, %v373
        %vm375 = vweird.f32 %v370
        %v376 = vsel %vm375, %v370, %v374
        %v377 = vmul.f32 %v369, %v376
        %v378 = vld [vmem:[%s1] sm:$0xf]
        %vm379 = vcmask 31744
        %v381 = vsel %vm379, %v378, 0
        %v384 = vsel %vm304, %v377, 0
        %386 = vmatpush.msra.mxu0 0.0
        %387 = vmatpush.msra.mxu0 0.0
        %388 = vmatpush.msra.mxu0 0.0
        %389 = vmatpush.msra.mxu0 0.0
        %390 = vmatpush.msra.mxu0 0.0
        %391 = vmatpush.msra.mxu0 0.0
        %392 = vmatpush.msra.mxu0 0.0
        %393 = vmatpush.msra.mxu0 0.0
        %394 = vmatpush.msra.mxu0 0.0
        %395 = vmatpush.msra.mxu0 0.0
        %396 = vmatpush.msra.mxu0 0.0
        %397 = vmatpush.msra.mxu0 0.0
        %398 = vmatpush.msra.mxu0 0.0
        %399 = vmatpush.msra.mxu0 0.0
        %400 = vmatpush.msra.mxu0 0.0
        %401 = vmatpush.msra.mxu0 %v384
        %402 = vmatmul.f32.gmra.mxu0 %v381
        %v403 = vpop.f32.mrf.mxu0
        %v404 = vadd.f32 0.0, %v403
        %405 = vdwg.mxu0
        %v406 = vxor.u32 %v404, 2147483648
        %v407 = vmul.f32 %v406, 1.442695
        %v408 = vpow.pop %v407
        %v409 = vadd.f32 %v408, 1.0
        %v410 = vrcp.pop %v409
        %v411 = vmul.f32 %v409, %v410
        %v412 = vsub.f32 1.0, %v411
        %v413 = vmul.f32 %v410, %v412
        %v414 = vadd.f32 %v410, %v413
        %vm415 = vweird.f32 %v409
        %vm416 = vweird.f32 %v410
        %vm417 = vmor %vm415, %vm416
        %v418 = vsel %vm417, %v410, %v414
        %v419 = vand.u32 2147483647, %v409
        %vm420 = vcmp.eq.f32.partialorder %v419, 8.507059e+37
        %v421 = vand.u32 %v409, 2147483648
        %v422 = vor.u32 1.1754944e-38, %v421
        %v423 = vsel %vm420, %v422, %v418
        %v424 = vmul.f32 1.0, %v423
        %v425 = vadd.f32 %v424, 1.0
        %427 = vset.pattern.permute.xlu0 0
        %428 = vperm.xlu0 %427, %v425
        %v429 = vpop.permute.xlu0 %428
        %v431 = vunpack.c.l.s4 839922192
        %v432 = vunpack.c.0.s8 %v431
        %v433 = vperm.slane %v429, %v432
        %v435 = vmul.f32 %v189, %v433
        %v436 = vmul.f32 %v190, %v433
        %v437 = vmul.f32 %v191, %v433
        %v438 = vmul.f32 %v192, %v433
        %v439 = vmul.f32 %v193, %v433
        %v440 = vmul.f32 %v194, %v433
        %v441 = vmul.f32 %v195, %v433
        %v442 = vmul.f32 %v196, %v433
        %v443 = vmul.f32 %v197, %v433
        %v444 = vmul.f32 %v198, %v433
        %v445 = vmul.f32 %v199, %v433
        %v446 = vmul.f32 %v200, %v433
        %v447 = vmul.f32 %v201, %v433
        %v448 = vmul.f32 %v202, %v433
        %v449 = vmul.f32 %v203, %v433
        %v450 = vmul.f32 %v204, %v433
        %v451 = vld [vmem:[%s2] sm:$0xff]
        %468 = vst [vmem:[#allocation1] ss:$2 sm:$0xff] %v435
        %s469 = scalar_lea.vmem [#allocation1], 16
        %470 = vst [vmem:[%s469] ss:$2 sm:$0xff] %v436
        %s471 = scalar_lea.vmem [#allocation1], 32
        %472 = vst [vmem:[%s471] ss:$2 sm:$0xff] %v437
        %s473 = scalar_lea.vmem [#allocation1], 48
        %474 = vst [vmem:[%s473] ss:$2 sm:$0xff] %v438
        %v475 = vld.sshfl [vmem:[#allocation1] sm:$0xff pattern:$0x75316420]
        %v476 = vld.sshfl [vmem:[#allocation1 + $0x8] sm:$0xff pattern:$0x75316420]
        %v477 = vld.sshfl [vmem:[#allocation1 + $0x10] sm:$0xff pattern:$0x75316420]
        %v478 = vld.sshfl [vmem:[#allocation1 + $0x18] sm:$0xff pattern:$0x75316420]
        %v479 = vld.sshfl [vmem:[#allocation1 + $0x20] sm:$0xff pattern:$0x75316420]
        %v480 = vld.sshfl [vmem:[#allocation1 + $0x28] sm:$0xff pattern:$0x75316420]
        %v481 = vld.sshfl [vmem:[#allocation1 + $0x30] sm:$0xff pattern:$0x75316420]
        %v482 = vld.sshfl [vmem:[#allocation1 + $0x38] sm:$0xff pattern:$0x75316420]
        %483 = vst [vmem:[#allocation1] ss:$2 sm:$0xff] %v439
        %484 = vst [vmem:[%s469] ss:$2 sm:$0xff] %v440
        %485 = vst [vmem:[%s471] ss:$2 sm:$0xff] %v441
        %486 = vst [vmem:[%s473] ss:$2 sm:$0xff] %v442
        %v487 = vld.sshfl [vmem:[#allocation1] sm:$0xff pattern:$0x75316420]
        %v488 = vld.sshfl [vmem:[#allocation1 + $0x8] sm:$0xff pattern:$0x75316420]
        %v489 = vld.sshfl [vmem:[#allocation1 + $0x10] sm:$0xff pattern:$0x75316420]
        %v490 = vld.sshfl [vmem:[#allocation1 + $0x18] sm:$0xff pattern:$0x75316420]
        %v491 = vld.sshfl [vmem:[#allocation1 + $0x20] sm:$0xff pattern:$0x75316420]
        %v492 = vld.sshfl [vmem:[#allocation1 + $0x28] sm:$0xff pattern:$0x75316420]
        %v493 = vld.sshfl [vmem:[#allocation1 + $0x30] sm:$0xff pattern:$0x75316420]
        %v494 = vld.sshfl [vmem:[#allocation1 + $0x38] sm:$0xff pattern:$0x75316420]
        %495 = vst [vmem:[#allocation1] ss:$2 sm:$0xff] %v443
        %496 = vst [vmem:[%s469] ss:$2 sm:$0xff] %v444
        %497 = vst [vmem:[%s471] ss:$2 sm:$0xff] %v445
        %498 = vst [vmem:[%s473] ss:$2 sm:$0xff] %v446
        %v499 = vld.sshfl [vmem:[#allocation1] sm:$0xff pattern:$0x75316420]
        %v500 = vld.sshfl [vmem:[#allocation1 + $0x8] sm:$0xff pattern:$0x75316420]
        %v501 = vld.sshfl [vmem:[#allocation1 + $0x10] sm:$0xff pattern:$0x75316420]
        %v502 = vld.sshfl [vmem:[#allocation1 + $0x18] sm:$0xff pattern:$0x75316420]
        %v503 = vld.sshfl [vmem:[#allocation1 + $0x20] sm:$0xff pattern:$0x75316420]
        %v504 = vld.sshfl [vmem:[#allocation1 + $0x28] sm:$0xff pattern:$0x75316420]
        %v505 = vld.sshfl [vmem:[#allocation1 + $0x30] sm:$0xff pattern:$0x75316420]
        %v506 = vld.sshfl [vmem:[#allocation1 + $0x38] sm:$0xff pattern:$0x75316420]
        %507 = vst [vmem:[#allocation1] ss:$2 sm:$0xff] %v447
        %508 = vst [vmem:[%s469] ss:$2 sm:$0xff] %v448
        %509 = vst [vmem:[%s471] ss:$2 sm:$0xff] %v449
        %510 = vst [vmem:[%s473] ss:$2 sm:$0xff] %v450
        %v511 = vld.sshfl [vmem:[#allocation1] sm:$0xff pattern:$0x75316420]
        %v512 = vld.sshfl [vmem:[#allocation1 + $0x8] sm:$0xff pattern:$0x75316420]
        %v513 = vld.sshfl [vmem:[#allocation1 + $0x10] sm:$0xff pattern:$0x75316420]
        %v514 = vld.sshfl [vmem:[#allocation1 + $0x18] sm:$0xff pattern:$0x75316420]
        %v515 = vld.sshfl [vmem:[#allocation1 + $0x20] sm:$0xff pattern:$0x75316420]
        %v516 = vld.sshfl [vmem:[#allocation1 + $0x28] sm:$0xff pattern:$0x75316420]
        %v517 = vld.sshfl [vmem:[#allocation1 + $0x30] sm:$0xff pattern:$0x75316420]
        %v518 = vld.sshfl [vmem:[#allocation1 + $0x38] sm:$0xff pattern:$0x75316420]
        %v520 = vsel %vm379, %v451, 0
        %v522 = vsel %vm304, %v475, 0
        %v524 = vsel %vm304, %v476, 0
        %v526 = vsel %vm304, %v477, 0
        %v528 = vsel %vm304, %v478, 0
        %v530 = vsel %vm304, %v479, 0
        %v532 = vsel %vm304, %v480, 0
        %v534 = vsel %vm304, %v481, 0
        %v536 = vsel %vm304, %v482, 0
        %v538 = vsel %vm304, %v487, 0
        %v540 = vsel %vm304, %v488, 0
        %v542 = vsel %vm304, %v489, 0
        %v544 = vsel %vm304, %v490, 0
        %v546 = vsel %vm304, %v491, 0
        %v548 = vsel %vm304, %v492, 0
        %v550 = vsel %vm304, %v493, 0
        %v552 = vsel %vm304, %v494, 0
        %v554 = vsel %vm304, %v499, 0
        %v556 = vsel %vm304, %v500, 0
        %v558 = vsel %vm304, %v501, 0
        %v560 = vsel %vm304, %v502, 0
        %v562 = vsel %vm304, %v503, 0
        %v564 = vsel %vm304, %v504, 0
        %v566 = vsel %vm304, %v505, 0
        %v568 = vsel %vm304, %v506, 0
        %v570 = vsel %vm304, %v511, 0
        %v572 = vsel %vm304, %v512, 0
        %v574 = vsel %vm304, %v513, 0
        %v576 = vsel %vm304, %v514, 0
        %v578 = vsel %vm304, %v515, 0
        %v580 = vsel %vm304, %v516, 0
        %v582 = vsel %vm304, %v517, 0
        %v584 = vsel %vm304, %v518, 0
        %586 = vmatpush.msra.mxu0 0.0
        %587 = vmatpush.msra.mxu0 0.0
        %588 = vmatpush.msra.mxu0 0.0
        %589 = vmatpush.msra.mxu0 0.0
        %590 = vmatpush.msra.mxu0 0.0
        %591 = vmatpush.msra.mxu0 0.0
        %592 = vmatpush.msra.mxu0 0.0
        %593 = vmatpush.msra.mxu0 0.0
        %594 = vmatpush.msra.mxu0 0.0
        %595 = vmatpush.msra.mxu0 0.0
        %596 = vmatpush.msra.mxu0 0.0
        %597 = vmatpush.msra.mxu0 0.0
        %598 = vmatpush.msra.mxu0 0.0
        %599 = vmatpush.msra.mxu0 0.0
        %600 = vmatpush.msra.mxu0 0.0
        %601 = vmatpush.msra.mxu0 %v522
        %602 = vmatmul.f32.gmra.mxu0 %v520
        %v603 = vpop.f32.mrf.mxu0
        %v604 = vadd.f32 0.0, %v603
        %605 = vdwg.mxu0
        %606 = vmatpush.msra.mxu0 0.0
        %607 = vmatpush.msra.mxu0 0.0
        %608 = vmatpush.msra.mxu0 0.0
        %609 = vmatpush.msra.mxu0 0.0
        %610 = vmatpush.msra.mxu0 0.0
        %611 = vmatpush.msra.mxu0 0.0
        %612 = vmatpush.msra.mxu0 0.0
        %613 = vmatpush.msra.mxu0 0.0
        %614 = vmatpush.msra.mxu0 0.0
        %615 = vmatpush.msra.mxu0 0.0
        %616 = vmatpush.msra.mxu0 0.0
        %617 = vmatpush.msra.mxu0 0.0
        %618 = vmatpush.msra.mxu0 0.0
        %619 = vmatpush.msra.mxu0 0.0
        %620 = vmatpush.msra.mxu0 0.0
        %621 = vmatpush.msra.mxu0 %v524
        %622 = vmatmul.f32.gmra.mxu0 %v520
        %v623 = vpop.f32.mrf.mxu0
        %v624 = vadd.f32 0.0, %v623
        %625 = vdwg.mxu0
        %626 = vmatpush.msra.mxu0 0.0
        %627 = vmatpush.msra.mxu0 0.0
        %628 = vmatpush.msra.mxu0 0.0
        %629 = vmatpush.msra.mxu0 0.0
        %630 = vmatpush.msra.mxu0 0.0
        %631 = vmatpush.msra.mxu0 0.0
        %632 = vmatpush.msra.mxu0 0.0
        %633 = vmatpush.msra.mxu0 0.0
        %634 = vmatpush.msra.mxu0 0.0
        %635 = vmatpush.msra.mxu0 0.0
        %636 = vmatpush.msra.mxu0 0.0
        %637 = vmatpush.msra.mxu0 0.0
        %638 = vmatpush.msra.mxu0 0.0
        %639 = vmatpush.msra.mxu0 0.0
        %640 = vmatpush.msra.mxu0 0.0
        %641 = vmatpush.msra.mxu0 %v526
        %642 = vmatmul.f32.gmra.mxu0 %v520
        %v643 = vpop.f32.mrf.mxu0
        %v644 = vadd.f32 0.0, %v643
        %645 = vdwg.mxu0
        %646 = vmatpush.msra.mxu0 0.0
        %647 = vmatpush.msra.mxu0 0.0
        %648 = vmatpush.msra.mxu0 0.0
        %649 = vmatpush.msra.mxu0 0.0
        %650 = vmatpush.msra.mxu0 0.0
        %651 = vmatpush.msra.mxu0 0.0
        %652 = vmatpush.msra.mxu0 0.0
        %653 = vmatpush.msra.mxu0 0.0
        %654 = vmatpush.msra.mxu0 0.0
        %655 = vmatpush.msra.mxu0 0.0
        %656 = vmatpush.msra.mxu0 0.0
        %657 = vmatpush.msra.mxu0 0.0
        %658 = vmatpush.msra.mxu0 0.0
        %659 = vmatpush.msra.mxu0 0.0
        %660 = vmatpush.msra.mxu0 0.0
        %661 = vmatpush.msra.mxu0 %v528
        %662 = vmatmul.f32.gmra.mxu0 %v520
        %v663 = vpop.f32.mrf.mxu0
        %v664 = vadd.f32 0.0, %v663
        %665 = vdwg.mxu0
        %666 = vmatpush.msra.mxu0 0.0
        %667 = vmatpush.msra.mxu0 0.0
        %668 = vmatpush.msra.mxu0 0.0
        %669 = vmatpush.msra.mxu0 0.0
        %670 = vmatpush.msra.mxu0 0.0
        %671 = vmatpush.msra.mxu0 0.0
        %672 = vmatpush.msra.mxu0 0.0
        %673 = vmatpush.msra.mxu0 0.0
        %674 = vmatpush.msra.mxu0 0.0
        %675 = vmatpush.msra.mxu0 0.0
        %676 = vmatpush.msra.mxu0 0.0
        %677 = vmatpush.msra.mxu0 0.0
        %678 = vmatpush.msra.mxu0 0.0
        %679 = vmatpush.msra.mxu0 0.0
        %680 = vmatpush.msra.mxu0 0.0
        %681 = vmatpush.msra.mxu0 %v530
        %682 = vmatmul.f32.gmra.mxu0 %v520
        %v683 = vpop.f32.mrf.mxu0
        %v684 = vadd.f32 0.0, %v683
        %685 = vdwg.mxu0
        %686 = vmatpush.msra.mxu0 0.0
        %687 = vmatpush.msra.mxu0 0.0
        %688 = vmatpush.msra.mxu0 0.0
        %689 = vmatpush.msra.mxu0 0.0
        %690 = vmatpush.msra.mxu0 0.0
        %691 = vmatpush.msra.mxu0 0.0
        %692 = vmatpush.msra.mxu0 0.0
        %693 = vmatpush.msra.mxu0 0.0
        %694 = vmatpush.msra.mxu0 0.0
        %695 = vmatpush.msra.mxu0 0.0
        %696 = vmatpush.msra.mxu0 0.0
        %697 = vmatpush.msra.mxu0 0.0
        %698 = vmatpush.msra.mxu0 0.0
        %699 = vmatpush.msra.mxu0 0.0
        %700 = vmatpush.msra.mxu0 0.0
        %701 = vmatpush.msra.mxu0 %v532
        %702 = vmatmul.f32.gmra.mxu0 %v520
        %v703 = vpop.f32.mrf.mxu0
        %v704 = vadd.f32 0.0, %v703
        %705 = vdwg.mxu0
        %706 = vmatpush.msra.mxu0 0.0
        %707 = vmatpush.msra.mxu0 0.0
        %708 = vmatpush.msra.mxu0 0.0
        %709 = vmatpush.msra.mxu0 0.0
        %710 = vmatpush.msra.mxu0 0.0
        %711 = vmatpush.msra.mxu0 0.0
        %712 = vmatpush.msra.mxu0 0.0
        %713 = vmatpush.msra.mxu0 0.0
        %714 = vmatpush.msra.mxu0 0.0
        %715 = vmatpush.msra.mxu0 0.0
        %716 = vmatpush.msra.mxu0 0.0
        %717 = vmatpush.msra.mxu0 0.0
        %718 = vmatpush.msra.mxu0 0.0
        %719 = vmatpush.msra.mxu0 0.0
        %720 = vmatpush.msra.mxu0 0.0
        %721 = vmatpush.msra.mxu0 %v534
        %722 = vmatmul.f32.gmra.mxu0 %v520
        %v723 = vpop.f32.mrf.mxu0
        %v724 = vadd.f32 0.0, %v723
        %725 = vdwg.mxu0
        %726 = vmatpush.msra.mxu0 0.0
        %727 = vmatpush.msra.mxu0 0.0
        %728 = vmatpush.msra.mxu0 0.0
        %729 = vmatpush.msra.mxu0 0.0
        %730 = vmatpush.msra.mxu0 0.0
        %731 = vmatpush.msra.mxu0 0.0
        %732 = vmatpush.msra.mxu0 0.0
        %733 = vmatpush.msra.mxu0 0.0
        %734 = vmatpush.msra.mxu0 0.0
        %735 = vmatpush.msra.mxu0 0.0
        %736 = vmatpush.msra.mxu0 0.0
        %737 = vmatpush.msra.mxu0 0.0
        %738 = vmatpush.msra.mxu0 0.0
        %739 = vmatpush.msra.mxu0 0.0
        %740 = vmatpush.msra.mxu0 0.0
        %741 = vmatpush.msra.mxu0 %v536
        %742 = vmatmul.f32.gmra.mxu0 %v520
        %v743 = vpop.f32.mrf.mxu0
        %v744 = vadd.f32 0.0, %v743
        %745 = vdwg.mxu0
        %746 = vmatpush.msra.mxu0 0.0
        %747 = vmatpush.msra.mxu0 0.0
        %748 = vmatpush.msra.mxu0 0.0
        %749 = vmatpush.msra.mxu0 0.0
        %750 = vmatpush.msra.mxu0 0.0
        %751 = vmatpush.msra.mxu0 0.0
        %752 = vmatpush.msra.mxu0 0.0
        %753 = vmatpush.msra.mxu0 0.0
        %754 = vmatpush.msra.mxu0 0.0
        %755 = vmatpush.msra.mxu0 0.0
        %756 = vmatpush.msra.mxu0 0.0
        %757 = vmatpush.msra.mxu0 0.0
        %758 = vmatpush.msra.mxu0 0.0
        %759 = vmatpush.msra.mxu0 0.0
        %760 = vmatpush.msra.mxu0 0.0
        %761 = vmatpush.msra.mxu0 %v538
        %762 = vmatmul.f32.gmra.mxu0 %v520
        %v763 = vpop.f32.mrf.mxu0
        %v764 = vadd.f32 0.0, %v763
        %765 = vdwg.mxu0
        %766 = vmatpush.msra.mxu0 0.0
        %767 = vmatpush.msra.mxu0 0.0
        %768 = vmatpush.msra.mxu0 0.0
        %769 = vmatpush.msra.mxu0 0.0
        %770 = vmatpush.msra.mxu0 0.0
        %771 = vmatpush.msra.mxu0 0.0
        %772 = vmatpush.msra.mxu0 0.0
        %773 = vmatpush.msra.mxu0 0.0
        %774 = vmatpush.msra.mxu0 0.0
        %775 = vmatpush.msra.mxu0 0.0
        %776 = vmatpush.msra.mxu0 0.0
        %777 = vmatpush.msra.mxu0 0.0
        %778 = vmatpush.msra.mxu0 0.0
        %779 = vmatpush.msra.mxu0 0.0
        %780 = vmatpush.msra.mxu0 0.0
        %781 = vmatpush.msra.mxu0 %v540
        %782 = vmatmul.f32.gmra.mxu0 %v520
        %v783 = vpop.f32.mrf.mxu0
        %v784 = vadd.f32 0.0, %v783
        %785 = vdwg.mxu0
        %786 = vmatpush.msra.mxu0 0.0
        %787 = vmatpush.msra.mxu0 0.0
        %788 = vmatpush.msra.mxu0 0.0
        %789 = vmatpush.msra.mxu0 0.0
        %790 = vmatpush.msra.mxu0 0.0
        %791 = vmatpush.msra.mxu0 0.0
        %792 = vmatpush.msra.mxu0 0.0
        %793 = vmatpush.msra.mxu0 0.0
        %794 = vmatpush.msra.mxu0 0.0
        %795 = vmatpush.msra.mxu0 0.0
        %796 = vmatpush.msra.mxu0 0.0
        %797 = vmatpush.msra.mxu0 0.0
        %798 = vmatpush.msra.mxu0 0.0
        %799 = vmatpush.msra.mxu0 0.0
        %800 = vmatpush.msra.mxu0 0.0
        %801 = vmatpush.msra.mxu0 %v542
        %802 = vmatmul.f32.gmra.mxu0 %v520
        %v803 = vpop.f32.mrf.mxu0
        %v804 = vadd.f32 0.0, %v803
        %805 = vdwg.mxu0
        %806 = vmatpush.msra.mxu0 0.0
        %807 = vmatpush.msra.mxu0 0.0
        %808 = vmatpush.msra.mxu0 0.0
        %809 = vmatpush.msra.mxu0 0.0
        %810 = vmatpush.msra.mxu0 0.0
        %811 = vmatpush.msra.mxu0 0.0
        %812 = vmatpush.msra.mxu0 0.0
        %813 = vmatpush.msra.mxu0 0.0
        %814 = vmatpush.msra.mxu0 0.0
        %815 = vmatpush.msra.mxu0 0.0
        %816 = vmatpush.msra.mxu0 0.0
        %817 = vmatpush.msra.mxu0 0.0
        %818 = vmatpush.msra.mxu0 0.0
        %819 = vmatpush.msra.mxu0 0.0
        %820 = vmatpush.msra.mxu0 0.0
        %821 = vmatpush.msra.mxu0 %v544
        %822 = vmatmul.f32.gmra.mxu0 %v520
        %v823 = vpop.f32.mrf.mxu0
        %v824 = vadd.f32 0.0, %v823
        %825 = vdwg.mxu0
        %826 = vmatpush.msra.mxu0 0.0
        %827 = vmatpush.msra.mxu0 0.0
        %828 = vmatpush.msra.mxu0 0.0
        %829 = vmatpush.msra.mxu0 0.0
        %830 = vmatpush.msra.mxu0 0.0
        %831 = vmatpush.msra.mxu0 0.0
        %832 = vmatpush.msra.mxu0 0.0
        %833 = vmatpush.msra.mxu0 0.0
        %834 = vmatpush.msra.mxu0 0.0
        %835 = vmatpush.msra.mxu0 0.0
        %836 = vmatpush.msra.mxu0 0.0
        %837 = vmatpush.msra.mxu0 0.0
        %838 = vmatpush.msra.mxu0 0.0
        %839 = vmatpush.msra.mxu0 0.0
        %840 = vmatpush.msra.mxu0 0.0
        %841 = vmatpush.msra.mxu0 %v546
        %842 = vmatmul.f32.gmra.mxu0 %v520
        %v843 = vpop.f32.mrf.mxu0
        %v844 = vadd.f32 0.0, %v843
        %845 = vdwg.mxu0
        %846 = vmatpush.msra.mxu0 0.0
        %847 = vmatpush.msra.mxu0 0.0
        %848 = vmatpush.msra.mxu0 0.0
        %849 = vmatpush.msra.mxu0 0.0
        %850 = vmatpush.msra.mxu0 0.0
        %851 = vmatpush.msra.mxu0 0.0
        %852 = vmatpush.msra.mxu0 0.0
        %853 = vmatpush.msra.mxu0 0.0
        %854 = vmatpush.msra.mxu0 0.0
        %855 = vmatpush.msra.mxu0 0.0
        %856 = vmatpush.msra.mxu0 0.0
        %857 = vmatpush.msra.mxu0 0.0
        %858 = vmatpush.msra.mxu0 0.0
        %859 = vmatpush.msra.mxu0 0.0
        %860 = vmatpush.msra.mxu0 0.0
        %861 = vmatpush.msra.mxu0 %v548
        %862 = vmatmul.f32.gmra.mxu0 %v520
        %v863 = vpop.f32.mrf.mxu0
        %v864 = vadd.f32 0.0, %v863
        %865 = vdwg.mxu0
        %866 = vmatpush.msra.mxu0 0.0
        %867 = vmatpush.msra.mxu0 0.0
        %868 = vmatpush.msra.mxu0 0.0
        %869 = vmatpush.msra.mxu0 0.0
        %870 = vmatpush.msra.mxu0 0.0
        %871 = vmatpush.msra.mxu0 0.0
        %872 = vmatpush.msra.mxu0 0.0
        %873 = vmatpush.msra.mxu0 0.0
        %874 = vmatpush.msra.mxu0 0.0
        %875 = vmatpush.msra.mxu0 0.0
        %876 = vmatpush.msra.mxu0 0.0
        %877 = vmatpush.msra.mxu0 0.0
        %878 = vmatpush.msra.mxu0 0.0
        %879 = vmatpush.msra.mxu0 0.0
        %880 = vmatpush.msra.mxu0 0.0
        %881 = vmatpush.msra.mxu0 %v550
        %882 = vmatmul.f32.gmra.mxu0 %v520
        %v883 = vpop.f32.mrf.mxu0
        %v884 = vadd.f32 0.0, %v883
        %885 = vdwg.mxu0
        %886 = vmatpush.msra.mxu0 0.0
        %887 = vmatpush.msra.mxu0 0.0
        %888 = vmatpush.msra.mxu0 0.0
        %889 = vmatpush.msra.mxu0 0.0
        %890 = vmatpush.msra.mxu0 0.0
        %891 = vmatpush.msra.mxu0 0.0
        %892 = vmatpush.msra.mxu0 0.0
        %893 = vmatpush.msra.mxu0 0.0
        %894 = vmatpush.msra.mxu0 0.0
        %895 = vmatpush.msra.mxu0 0.0
        %896 = vmatpush.msra.mxu0 0.0
        %897 = vmatpush.msra.mxu0 0.0
        %898 = vmatpush.msra.mxu0 0.0
        %899 = vmatpush.msra.mxu0 0.0
        %900 = vmatpush.msra.mxu0 0.0
        %901 = vmatpush.msra.mxu0 %v552
        %902 = vmatmul.f32.gmra.mxu0 %v520
        %v903 = vpop.f32.mrf.mxu0
        %v904 = vadd.f32 0.0, %v903
        %905 = vdwg.mxu0
        %906 = vmatpush.msra.mxu0 0.0
        %907 = vmatpush.msra.mxu0 0.0
        %908 = vmatpush.msra.mxu0 0.0
        %909 = vmatpush.msra.mxu0 0.0
        %910 = vmatpush.msra.mxu0 0.0
        %911 = vmatpush.msra.mxu0 0.0
        %912 = vmatpush.msra.mxu0 0.0
        %913 = vmatpush.msra.mxu0 0.0
        %914 = vmatpush.msra.mxu0 0.0
        %915 = vmatpush.msra.mxu0 0.0
        %916 = vmatpush.msra.mxu0 0.0
        %917 = vmatpush.msra.mxu0 0.0
        %918 = vmatpush.msra.mxu0 0.0
        %919 = vmatpush.msra.mxu0 0.0
        %920 = vmatpush.msra.mxu0 0.0
        %921 = vmatpush.msra.mxu0 %v554
        %922 = vmatmul.f32.gmra.mxu0 %v520
        %v923 = vpop.f32.mrf.mxu0
        %v924 = vadd.f32 0.0, %v923
        %925 = vdwg.mxu0
        %926 = vmatpush.msra.mxu0 0.0
        %927 = vmatpush.msra.mxu0 0.0
        %928 = vmatpush.msra.mxu0 0.0
        %929 = vmatpush.msra.mxu0 0.0
        %930 = vmatpush.msra.mxu0 0.0
        %931 = vmatpush.msra.mxu0 0.0
        %932 = vmatpush.msra.mxu0 0.0
        %933 = vmatpush.msra.mxu0 0.0
        %934 = vmatpush.msra.mxu0 0.0
        %935 = vmatpush.msra.mxu0 0.0
        %936 = vmatpush.msra.mxu0 0.0
        %937 = vmatpush.msra.mxu0 0.0
        %938 = vmatpush.msra.mxu0 0.0
        %939 = vmatpush.msra.mxu0 0.0
        %940 = vmatpush.msra.mxu0 0.0
        %941 = vmatpush.msra.mxu0 %v556
        %942 = vmatmul.f32.gmra.mxu0 %v520
        %v943 = vpop.f32.mrf.mxu0
        %v944 = vadd.f32 0.0, %v943
        %945 = vdwg.mxu0
        %946 = vmatpush.msra.mxu0 0.0
        %947 = vmatpush.msra.mxu0 0.0
        %948 = vmatpush.msra.mxu0 0.0
        %949 = vmatpush.msra.mxu0 0.0
        %950 = vmatpush.msra.mxu0 0.0
        %951 = vmatpush.msra.mxu0 0.0
        %952 = vmatpush.msra.mxu0 0.0
        %953 = vmatpush.msra.mxu0 0.0
        %954 = vmatpush.msra.mxu0 0.0
        %955 = vmatpush.msra.mxu0 0.0
        %956 = vmatpush.msra.mxu0 0.0
        %957 = vmatpush.msra.mxu0 0.0
        %958 = vmatpush.msra.mxu0 0.0
        %959 = vmatpush.msra.mxu0 0.0
        %960 = vmatpush.msra.mxu0 0.0
        %961 = vmatpush.msra.mxu0 %v558
        %962 = vmatmul.f32.gmra.mxu0 %v520
        %v963 = vpop.f32.mrf.mxu0
        %v964 = vadd.f32 0.0, %v963
        %965 = vdwg.mxu0
        %966 = vmatpush.msra.mxu0 0.0
        %967 = vmatpush.msra.mxu0 0.0
        %968 = vmatpush.msra.mxu0 0.0
        %969 = vmatpush.msra.mxu0 0.0
        %970 = vmatpush.msra.mxu0 0.0
        %971 = vmatpush.msra.mxu0 0.0
        %972 = vmatpush.msra.mxu0 0.0
        %973 = vmatpush.msra.mxu0 0.0
        %974 = vmatpush.msra.mxu0 0.0
        %975 = vmatpush.msra.mxu0 0.0
        %976 = vmatpush.msra.mxu0 0.0
        %977 = vmatpush.msra.mxu0 0.0
        %978 = vmatpush.msra.mxu0 0.0
        %979 = vmatpush.msra.mxu0 0.0
        %980 = vmatpush.msra.mxu0 0.0
        %981 = vmatpush.msra.mxu0 %v560
        %982 = vmatmul.f32.gmra.mxu0 %v520
        %v983 = vpop.f32.mrf.mxu0
        %v984 = vadd.f32 0.0, %v983
        %985 = vdwg.mxu0
        %986 = vmatpush.msra.mxu0 0.0
        %987 = vmatpush.msra.mxu0 0.0
        %988 = vmatpush.msra.mxu0 0.0
        %989 = vmatpush.msra.mxu0 0.0
        %990 = vmatpush.msra.mxu0 0.0
        %991 = vmatpush.msra.mxu0 0.0
        %992 = vmatpush.msra.mxu0 0.0
        %993 = vmatpush.msra.mxu0 0.0
        %994 = vmatpush.msra.mxu0 0.0
        %995 = vmatpush.msra.mxu0 0.0
        %996 = vmatpush.msra.mxu0 0.0
        %997 = vmatpush.msra.mxu0 0.0
        %998 = vmatpush.msra.mxu0 0.0
        %999 = vmatpush.msra.mxu0 0.0
        %1000 = vmatpush.msra.mxu0 0.0
        %1001 = vmatpush.msra.mxu0 %v562
        %1002 = vmatmul.f32.gmra.mxu0 %v520
        %v1003 = vpop.f32.mrf.mxu0
        %v1004 = vadd.f32 0.0, %v1003
        %1005 = vdwg.mxu0
        %1006 = vmatpush.msra.mxu0 0.0
        %1007 = vmatpush.msra.mxu0 0.0
        %1008 = vmatpush.msra.mxu0 0.0
        %1009 = vmatpush.msra.mxu0 0.0
        %1010 = vmatpush.msra.mxu0 0.0
        %1011 = vmatpush.msra.mxu0 0.0
        %1012 = vmatpush.msra.mxu0 0.0
        %1013 = vmatpush.msra.mxu0 0.0
        %1014 = vmatpush.msra.mxu0 0.0
        %1015 = vmatpush.msra.mxu0 0.0
        %1016 = vmatpush.msra.mxu0 0.0
        %1017 = vmatpush.msra.mxu0 0.0
        %1018 = vmatpush.msra.mxu0 0.0
        %1019 = vmatpush.msra.mxu0 0.0
        %1020 = vmatpush.msra.mxu0 0.0
        %1021 = vmatpush.msra.mxu0 %v564
        %1022 = vmatmul.f32.gmra.mxu0 %v520
        %v1023 = vpop.f32.mrf.mxu0
        %v1024 = vadd.f32 0.0, %v1023
        %1025 = vdwg.mxu0
        %1026 = vmatpush.msra.mxu0 0.0
        %1027 = vmatpush.msra.mxu0 0.0
        %1028 = vmatpush.msra.mxu0 0.0
        %1029 = vmatpush.msra.mxu0 0.0
        %1030 = vmatpush.msra.mxu0 0.0
        %1031 = vmatpush.msra.mxu0 0.0
        %1032 = vmatpush.msra.mxu0 0.0
        %1033 = vmatpush.msra.mxu0 0.0
        %1034 = vmatpush.msra.mxu0 0.0
        %1035 = vmatpush.msra.mxu0 0.0
        %1036 = vmatpush.msra.mxu0 0.0
        %1037 = vmatpush.msra.mxu0 0.0
        %1038 = vmatpush.msra.mxu0 0.0
        %1039 = vmatpush.msra.mxu0 0.0
        %1040 = vmatpush.msra.mxu0 0.0
        %1041 = vmatpush.msra.mxu0 %v566
        %1042 = vmatmul.f32.gmra.mxu0 %v520
        %v1043 = vpop.f32.mrf.mxu0
        %v1044 = vadd.f32 0.0, %v1043
        %1045 = vdwg.mxu0
        %1046 = vmatpush.msra.mxu0 0.0
        %1047 = vmatpush.msra.mxu0 0.0
        %1048 = vmatpush.msra.mxu0 0.0
        %1049 = vmatpush.msra.mxu0 0.0
        %1050 = vmatpush.msra.mxu0 0.0
        %1051 = vmatpush.msra.mxu0 0.0
        %1052 = vmatpush.msra.mxu0 0.0
        %1053 = vmatpush.msra.mxu0 0.0
        %1054 = vmatpush.msra.mxu0 0.0
        %1055 = vmatpush.msra.mxu0 0.0
        %1056 = vmatpush.msra.mxu0 0.0
        %1057 = vmatpush.msra.mxu0 0.0
        %1058 = vmatpush.msra.mxu0 0.0
        %1059 = vmatpush.msra.mxu0 0.0
        %1060 = vmatpush.msra.mxu0 0.0
        %1061 = vmatpush.msra.mxu0 %v568
        %1062 = vmatmul.f32.gmra.mxu0 %v520
        %v1063 = vpop.f32.mrf.mxu0
        %v1064 = vadd.f32 0.0, %v1063
        %1065 = vdwg.mxu0
        %1066 = vmatpush.msra.mxu0 0.0
        %1067 = vmatpush.msra.mxu0 0.0
        %1068 = vmatpush.msra.mxu0 0.0
        %1069 = vmatpush.msra.mxu0 0.0
        %1070 = vmatpush.msra.mxu0 0.0
        %1071 = vmatpush.msra.mxu0 0.0
        %1072 = vmatpush.msra.mxu0 0.0
        %1073 = vmatpush.msra.mxu0 0.0
        %1074 = vmatpush.msra.mxu0 0.0
        %1075 = vmatpush.msra.mxu0 0.0
        %1076 = vmatpush.msra.mxu0 0.0
        %1077 = vmatpush.msra.mxu0 0.0
        %1078 = vmatpush.msra.mxu0 0.0
        %1079 = vmatpush.msra.mxu0 0.0
        %1080 = vmatpush.msra.mxu0 0.0
        %1081 = vmatpush.msra.mxu0 %v570
        %1082 = vmatmul.f32.gmra.mxu0 %v520
        %v1083 = vpop.f32.mrf.mxu0
        %v1084 = vadd.f32 0.0, %v1083
        %1085 = vdwg.mxu0
        %1086 = vmatpush.msra.mxu0 0.0
        %1087 = vmatpush.msra.mxu0 0.0
        %1088 = vmatpush.msra.mxu0 0.0
        %1089 = vmatpush.msra.mxu0 0.0
        %1090 = vmatpush.msra.mxu0 0.0
        %1091 = vmatpush.msra.mxu0 0.0
        %1092 = vmatpush.msra.mxu0 0.0
        %1093 = vmatpush.msra.mxu0 0.0
        %1094 = vmatpush.msra.mxu0 0.0
        %1095 = vmatpush.msra.mxu0 0.0
        %1096 = vmatpush.msra.mxu0 0.0
        %1097 = vmatpush.msra.mxu0 0.0
        %1098 = vmatpush.msra.mxu0 0.0
        %1099 = vmatpush.msra.mxu0 0.0
        %1100 = vmatpush.msra.mxu0 0.0
        %1101 = vmatpush.msra.mxu0 %v572
        %1102 = vmatmul.f32.gmra.mxu0 %v520
        %v1103 = vpop.f32.mrf.mxu0
        %v1104 = vadd.f32 0.0, %v1103
        %1105 = vdwg.mxu0
        %1106 = vmatpush.msra.mxu0 0.0
        %1107 = vmatpush.msra.mxu0 0.0
        %1108 = vmatpush.msra.mxu0 0.0
        %1109 = vmatpush.msra.mxu0 0.0
        %1110 = vmatpush.msra.mxu0 0.0
        %1111 = vmatpush.msra.mxu0 0.0
        %1112 = vmatpush.msra.mxu0 0.0
        %1113 = vmatpush.msra.mxu0 0.0
        %1114 = vmatpush.msra.mxu0 0.0
        %1115 = vmatpush.msra.mxu0 0.0
        %1116 = vmatpush.msra.mxu0 0.0
        %1117 = vmatpush.msra.mxu0 0.0
        %1118 = vmatpush.msra.mxu0 0.0
        %1119 = vmatpush.msra.mxu0 0.0
        %1120 = vmatpush.msra.mxu0 0.0
        %1121 = vmatpush.msra.mxu0 %v574
        %1122 = vmatmul.f32.gmra.mxu0 %v520
        %v1123 = vpop.f32.mrf.mxu0
        %v1124 = vadd.f32 0.0, %v1123
        %1125 = vdwg.mxu0
        %1126 = vmatpush.msra.mxu0 0.0
        %1127 = vmatpush.msra.mxu0 0.0
        %1128 = vmatpush.msra.mxu0 0.0
        %1129 = vmatpush.msra.mxu0 0.0
        %1130 = vmatpush.msra.mxu0 0.0
        %1131 = vmatpush.msra.mxu0 0.0
        %1132 = vmatpush.msra.mxu0 0.0
        %1133 = vmatpush.msra.mxu0 0.0
        %1134 = vmatpush.msra.mxu0 0.0
        %1135 = vmatpush.msra.mxu0 0.0
        %1136 = vmatpush.msra.mxu0 0.0
        %1137 = vmatpush.msra.mxu0 0.0
        %1138 = vmatpush.msra.mxu0 0.0
        %1139 = vmatpush.msra.mxu0 0.0
        %1140 = vmatpush.msra.mxu0 0.0
        %1141 = vmatpush.msra.mxu0 %v576
        %1142 = vmatmul.f32.gmra.mxu0 %v520
        %v1143 = vpop.f32.mrf.mxu0
        %v1144 = vadd.f32 0.0, %v1143
        %1145 = vdwg.mxu0
        %1146 = vmatpush.msra.mxu0 0.0
        %1147 = vmatpush.msra.mxu0 0.0
        %1148 = vmatpush.msra.mxu0 0.0
        %1149 = vmatpush.msra.mxu0 0.0
        %1150 = vmatpush.msra.mxu0 0.0
        %1151 = vmatpush.msra.mxu0 0.0
        %1152 = vmatpush.msra.mxu0 0.0
        %1153 = vmatpush.msra.mxu0 0.0
        %1154 = vmatpush.msra.mxu0 0.0
        %1155 = vmatpush.msra.mxu0 0.0
        %1156 = vmatpush.msra.mxu0 0.0
        %1157 = vmatpush.msra.mxu0 0.0
        %1158 = vmatpush.msra.mxu0 0.0
        %1159 = vmatpush.msra.mxu0 0.0
        %1160 = vmatpush.msra.mxu0 0.0
        %1161 = vmatpush.msra.mxu0 %v578
        %1162 = vmatmul.f32.gmra.mxu0 %v520
        %v1163 = vpop.f32.mrf.mxu0
        %v1164 = vadd.f32 0.0, %v1163
        %1165 = vdwg.mxu0
        %1166 = vmatpush.msra.mxu0 0.0
        %1167 = vmatpush.msra.mxu0 0.0
        %1168 = vmatpush.msra.mxu0 0.0
        %1169 = vmatpush.msra.mxu0 0.0
        %1170 = vmatpush.msra.mxu0 0.0
        %1171 = vmatpush.msra.mxu0 0.0
        %1172 = vmatpush.msra.mxu0 0.0
        %1173 = vmatpush.msra.mxu0 0.0
        %1174 = vmatpush.msra.mxu0 0.0
        %1175 = vmatpush.msra.mxu0 0.0
        %1176 = vmatpush.msra.mxu0 0.0
        %1177 = vmatpush.msra.mxu0 0.0
        %1178 = vmatpush.msra.mxu0 0.0
        %1179 = vmatpush.msra.mxu0 0.0
        %1180 = vmatpush.msra.mxu0 0.0
        %1181 = vmatpush.msra.mxu0 %v580
        %1182 = vmatmul.f32.gmra.mxu0 %v520
        %v1183 = vpop.f32.mrf.mxu0
        %v1184 = vadd.f32 0.0, %v1183
        %1185 = vdwg.mxu0
        %1186 = vmatpush.msra.mxu0 0.0
        %1187 = vmatpush.msra.mxu0 0.0
        %1188 = vmatpush.msra.mxu0 0.0
        %1189 = vmatpush.msra.mxu0 0.0
        %1190 = vmatpush.msra.mxu0 0.0
        %1191 = vmatpush.msra.mxu0 0.0
        %1192 = vmatpush.msra.mxu0 0.0
        %1193 = vmatpush.msra.mxu0 0.0
        %1194 = vmatpush.msra.mxu0 0.0
        %1195 = vmatpush.msra.mxu0 0.0
        %1196 = vmatpush.msra.mxu0 0.0
        %1197 = vmatpush.msra.mxu0 0.0
        %1198 = vmatpush.msra.mxu0 0.0
        %1199 = vmatpush.msra.mxu0 0.0
        %1200 = vmatpush.msra.mxu0 0.0
        %1201 = vmatpush.msra.mxu0 %v582
        %1202 = vmatmul.f32.gmra.mxu0 %v520
        %v1203 = vpop.f32.mrf.mxu0
        %v1204 = vadd.f32 0.0, %v1203
        %1205 = vdwg.mxu0
        %1206 = vmatpush.msra.mxu0 0.0
        %1207 = vmatpush.msra.mxu0 0.0
        %1208 = vmatpush.msra.mxu0 0.0
        %1209 = vmatpush.msra.mxu0 0.0
        %1210 = vmatpush.msra.mxu0 0.0
        %1211 = vmatpush.msra.mxu0 0.0
        %1212 = vmatpush.msra.mxu0 0.0
        %1213 = vmatpush.msra.mxu0 0.0
        %1214 = vmatpush.msra.mxu0 0.0
        %1215 = vmatpush.msra.mxu0 0.0
        %1216 = vmatpush.msra.mxu0 0.0
        %1217 = vmatpush.msra.mxu0 0.0
        %1218 = vmatpush.msra.mxu0 0.0
        %1219 = vmatpush.msra.mxu0 0.0
        %1220 = vmatpush.msra.mxu0 0.0
        %1221 = vmatpush.msra.mxu0 %v584
        %1222 = vmatmul.f32.gmra.mxu0 %v520
        %v1223 = vpop.f32.mrf.mxu0
        %v1224 = vadd.f32 0.0, %v1223
        %1225 = vdwg.mxu0
        %1226 = vst [vmem:[%s188] sm:$0xff] %v604
        %1227 = vst [vmem:[%s188 + $0x8] sm:$0xff] %v624
        %1228 = vst [vmem:[%s188 + $0x10] sm:$0xff] %v644
        %1229 = vst [vmem:[%s188 + $0x18] sm:$0xff] %v664
        %1230 = vst [vmem:[%s188 + $0x20] sm:$0xff] %v684
        %1231 = vst [vmem:[%s188 + $0x28] sm:$0xff] %v704
        %1232 = vst [vmem:[%s188 + $0x30] sm:$0xff] %v724
        %1233 = vst [vmem:[%s188 + $0x38] sm:$0xff] %v744
        %1234 = vst [vmem:[%s188 + $0x40] sm:$0xff] %v764
        %1235 = vst [vmem:[%s188 + $0x48] sm:$0xff] %v784
        %1236 = vst [vmem:[%s188 + $0x50] sm:$0xff] %v804
        %1237 = vst [vmem:[%s188 + $0x58] sm:$0xff] %v824
        %1238 = vst [vmem:[%s188 + $0x60] sm:$0xff] %v844
        %1239 = vst [vmem:[%s188 + $0x68] sm:$0xff] %v864
        %1240 = vst [vmem:[%s188 + $0x70] sm:$0xff] %v884
        %1241 = vst [vmem:[%s188 + $0x78] sm:$0xff] %v904
        %1242 = vst [vmem:[%s188 + $0x80] sm:$0xff] %v924
        %1243 = vst [vmem:[%s188 + $0x88] sm:$0xff] %v944
        %1244 = vst [vmem:[%s188 + $0x90] sm:$0xff] %v964
        %1245 = vst [vmem:[%s188 + $0x98] sm:$0xff] %v984
        %1246 = vst [vmem:[%s188 + $0xa0] sm:$0xff] %v1004
        %1247 = vst [vmem:[%s188 + $0xa8] sm:$0xff] %v1024
        %1248 = vst [vmem:[%s188 + $0xb0] sm:$0xff] %v1044
        %1249 = vst [vmem:[%s188 + $0xb8] sm:$0xff] %v1064
        %1250 = vst [vmem:[%s188 + $0xc0] sm:$0xff] %v1084
        %1251 = vst [vmem:[%s188 + $0xc8] sm:$0xff] %v1104
        %1252 = vst [vmem:[%s188 + $0xd0] sm:$0xff] %v1124
        %1253 = vst [vmem:[%s188 + $0xd8] sm:$0xff] %v1144
        %1254 = vst [vmem:[%s188 + $0xe0] sm:$0xff] %v1164
        %1255 = vst [vmem:[%s188 + $0xe8] sm:$0xff] %v1184
        %1256 = vst [vmem:[%s188 + $0xf0] sm:$0xff] %v1204
        %1257 = vst [vmem:[%s188 + $0xf8] sm:$0xff] %v1224
        %s1258 = sand.u32 %s96, 1
        %s1259 = scalar_lea.sflag [#allocation4], %s1258
        %s1260 = sand.u32 %s96, 1
        %s1261 = smul.addr %s1260, 256
        %s1262 = scalar_lea.vmem [#allocation5], %s1261
        // Predicated region
        $region37: #{tpu_custom_call.1} parent=31 // pred_check
          %p1263 = pneg %p106
        $region38: #{tpu_custom_call.1} parent=31 // pred_check_branch
          %1265 = sbr.rel (%p1263) target = $region40
        $region39: #{tpu_custom_call.1} parent=31 // pred_region
          %1267 = vsyncadd %s1259, 0
          %s1268 = smul.addr %s20, 32
          %s1269 = smul.addr %s1268, 8
          %s1270 = scalar_lea.hbm %s3, %s1269
          %s1272 = sshll.u32 %s1262, 4
          %s1273 = int_to_ptr.vmem [resolvable:$true] %s1272
          %s1274 = sshll.u32 %s1270, 4
          %s1275 = int_to_ptr.hbm [resolvable:$true] %s1274
          %1277 = dma.vmem_to_hbm [thread:$0]  %s1273, 4096, %s1275, %s1259
        $region40: #{tpu_custom_call.1} parent=31 // pred_fallthru
          _
      $region32: #{tpu_custom_call.1} parent=5 // pred_fallthru
        _
      %p1278 = scmp.le.s32.totalorder 2, %s15
      // Predicated region
      $region41: #{tpu_custom_call.1} parent=5 // pred_check
        %p1279 = pneg %p1278
      $region42: #{tpu_custom_call.1} parent=5 // pred_check_branch
        %1281 = sbr.rel (%p1279) target = $region44
      $region43: #{tpu_custom_call.1} parent=5 // pred_region
        %s1282 = ssub.s32 %s15, 2
        // Predicated region
        $region45: #{tpu_custom_call.1} parent=43 // pred_check
          %p1283 = pneg %p112
        $region46: #{tpu_custom_call.1} parent=43 // pred_check_branch
          %1285 = sbr.rel (%p1283) target = $region48
        $region47: #{tpu_custom_call.1} parent=43 // pred_region
          %s1286 = sand.u32 %s97, 1
          %s1287 = scalar_lea.sflag [#allocation4], %s1286
          %s1288 = sand.u32 %s97, 1
          %s1289 = smul.addr %s1288, 256
          %s1290 = scalar_lea.vmem [#allocation5], %s1289
          %1292 = dma.done %s1287, 4096
        $region48: #{tpu_custom_call.1} parent=43 // pred_fallthru
          _
      $region44: #{tpu_custom_call.1} parent=5 // pred_fallthru
        _
    $region6: #{tpu_custom_call.1} parent=1 // loop_footer
      %s19 = sadd.s32 1, %s15
    $region7: #{tpu_custom_call.1} parent=1 // loop_footer_branch
      %14 = sbr.rel target = $region3
    $region8: #{tpu_custom_call.1} parent=1 // loop_exit
      _
    %1293 = vsyncpa [#allocation3], 1
    %s1294 = scalar_lea.sflag [#allocation3], 1
    %1295 = vsyncpa %s1294, 1
    %1296 = vsyncpa [#allocation4], 1
    %s1297 = scalar_lea.sflag [#allocation4], 1
    %1298 = vsyncpa %s1297, 1

</llo_original>
